<compile_context>
chip_gen: v6e
topology: v6e:2x2x1
jax: 0.10.0
libtpu: 0.0.40
codegen_flags: <defaults>
</compile_context>

<pallas_src>
import jax
import jax.numpy as jnp
from jax.experimental import pallas as pl
from jax.experimental.pallas import tpu as pltpu

EPS = 1e-5


def _bn_affine_kernel(x_ref, scale_ref, bias_ref, o_ref):
    # x_ref: (row_block, hw_block) in the input dtype.
    # scale_ref / bias_ref: (row_block, 1) float32 per-row (= per (n, c)) affine.
    # bf16 * f32 promotes to f32, so the arithmetic is done in float32
    # (matching PyTorch's x.float()) without materializing an f32 tile copy.
    y = x_ref[...] * scale_ref[...] + bias_ref[...]
    o_ref[...] = y.astype(o_ref.dtype)          # .to(input_type)


def _pick_block(dim, target, align):
    """Largest multiple of `align` that divides `dim` and is <= target.

    Falls back to the full dim when `dim` is not a multiple of `align`
    (a block equal to the full array dim is always legal)."""
    if dim % align != 0 or dim <= align:
        return dim
    best = align
    b = align
    limit = min(dim, max(target, align))
    while b <= limit:
        if dim % b == 0:
            best = b
        b += align
    return best


def batchnorm_wrapper_forward(x_nchw, running_mean, running_var, gamma, beta,
                              *, eps=EPS):
    """Eval-mode BatchNorm2d with float32 internal compute, output in x's dtype.

    x_nchw: (N, C, H, W), any float dtype.   params: (C,) float32-ish.
    """
    N, C, H, W = x_nchw.shape
    in_dtype = x_nchw.dtype
    rows, hw = N * C, H * W

    # Free (contiguous) reshape: keep NCHW memory order, lane-dense last axis = H*W.
    x2d = x_nchw.reshape(rows, hw)

    # Fold BN(eval) into a per-channel affine computed once in the wrapper.
    scale_c = (gamma.astype(jnp.float32)
               * jax.lax.rsqrt(running_var.astype(jnp.float32) + eps))
    bias_c = beta.astype(jnp.float32) - running_mean.astype(jnp.float32) * scale_c
    # Row r of x2d corresponds to channel r % C.
    scale_rows = jnp.tile(scale_c, N).reshape(rows, 1)
    bias_rows = jnp.tile(bias_c, N).reshape(rows, 1)

    # Tile selection: lane-dense hw blocks (multiple of 128), sublane-aligned row
    # blocks (multiple of 8), targeting ~1M elements per block so double-buffered
    # in+out stays well under the scoped VMEM default on all generations
    # (incl. v7x's 64 MiB physical / 32 MiB scoped budget).
    hw_block = _pick_block(hw, 8192, 128)
    row_block = _pick_block(rows, max(8, (1 << 20) // hw_block), 8)
    grid = (rows // row_block, hw // hw_block)

    data_spec = pl.BlockSpec((row_block, hw_block), lambda i, j: (i, j))
    param_spec = pl.BlockSpec((row_block, 1), lambda i, j: (i, 0))

    out2d = pl.pallas_call(
        _bn_affine_kernel,
        out_shape=jax.ShapeDtypeStruct((rows, hw), in_dtype),
        grid_spec=pltpu.PrefetchScalarGridSpec(
            num_scalar_prefetch=0,
            grid=grid,
            in_specs=[data_spec, param_spec, param_spec],
            out_specs=data_spec,
        ),
        compiler_params=pltpu.CompilerParams(
            dimension_semantics=("parallel", "parallel")),
    )(x2d, scale_rows, bias_rows)

    # Free reshape back to NCHW.
    return out2d.reshape(N, C, H, W)


if __name__ == "__main__":
    key = jax.random.PRNGKey(0)
    kx, km, kv, kg, kb = jax.random.split(key, 5)

    N, C, H, W = 2, 4, 16, 16
    # Input in bfloat16 to exercise the float() / .to(input_type) casts.
    x = jax.random.normal(kx, (N, C, H, W), dtype=jnp.float32).astype(jnp.bfloat16)

    # Deterministic synthetic BatchNorm2d(eval) parameters / running stats.
    running_mean = jax.random.normal(km, (C,), dtype=jnp.float32) * 0.1
    running_var = jax.random.uniform(kv, (C,), dtype=jnp.float32,
                                     minval=0.5, maxval=1.5)
    gamma = 1.0 + 0.1 * jax.random.normal(kg, (C,), dtype=jnp.float32)
    beta = 0.1 * jax.random.normal(kb, (C,), dtype=jnp.float32)

    out = batchnorm_wrapper_forward(x, running_mean, running_var, gamma, beta)
    out = jax.block_until_ready(out)

    # Reference check in plain JAX (same math, float32 compute, cast back).
    xf = x.astype(jnp.float32)
    ref = ((xf - running_mean[None, :, None, None])
           / jnp.sqrt(running_var[None, :, None, None] + EPS)
           * gamma[None, :, None, None]
           + beta[None, :, None, None]).astype(x.dtype)
    assert out.shape == x.shape and out.dtype == x.dtype
    assert jnp.allclose(out.astype(jnp.float32), ref.astype(jnp.float32),
                        atol=1e-2, rtol=1e-2)

    print("KERNEL_OK")
</pallas_src>

<mosaic_0001>
module attributes {stable_mosaic.version = 11 : i64} {
  func.func @_bn_affine_kernel(%arg0: i32, %arg1: i32, %arg2: memref<8x256xbf16, #tpu.memory_space<vmem>>, %arg3: memref<8x1xf32, #tpu.memory_space<vmem>>, %arg4: memref<8x1xf32, #tpu.memory_space<vmem>>, %arg5: memref<8x256xbf16, #tpu.memory_space<vmem>>) attributes {dimension_semantics = [#tpu.dimension_semantics<parallel>, #tpu.dimension_semantics<parallel>], iteration_bounds = array<i64: 1, 1>, scalar_prefetch = 0 : i64, scratch_operands = 0 : i64, tpu.core_type = #tpu.core_type<tc>, window_params = [{transform_indices = @transform_0, window_bounds = array<i64: 8, 256>}, {transform_indices = @transform_1, window_bounds = array<i64: 8, 1>}, {transform_indices = @transform_2, window_bounds = array<i64: 8, 1>}, {transform_indices = @transform_3, window_bounds = array<i64: 8, 256>}]} {
    %c0 = arith.constant 0 : index
    %c0_0 = arith.constant 0 : index
    %0 = vector.load %arg2[%c0, %c0_0] : memref<8x256xbf16, #tpu.memory_space<vmem>>, vector<8x256xbf16>
    %c0_1 = arith.constant 0 : index
    %c0_2 = arith.constant 0 : index
    %1 = vector.load %arg3[%c0_1, %c0_2] : memref<8x1xf32, #tpu.memory_space<vmem>>, vector<8x1xf32>
    %2 = arith.extf %0 : vector<8x256xbf16> to vector<8x256xf32>
    %3 = vector.broadcast %1 : vector<8x1xf32> to vector<8x256xf32>
    %4 = arith.mulf %2, %3 : vector<8x256xf32>
    %c0_3 = arith.constant 0 : index
    %c0_4 = arith.constant 0 : index
    %5 = vector.load %arg4[%c0_3, %c0_4] : memref<8x1xf32, #tpu.memory_space<vmem>>, vector<8x1xf32>
    %6 = vector.broadcast %5 : vector<8x1xf32> to vector<8x256xf32>
    %7 = arith.addf %4, %6 : vector<8x256xf32>
    %8 = arith.truncf %7 : vector<8x256xf32> to vector<8x256xbf16>
    %c0_5 = arith.constant 0 : index
    %c0_6 = arith.constant 0 : index
    %9 = vector.load %arg5[%c0_5, %c0_6] : memref<8x256xbf16, #tpu.memory_space<vmem>>, vector<8x256xbf16>
    tpu.vector_store %arg5[%c0_5, %c0_6], %8 {strides = array<i32>} : memref<8x256xbf16, #tpu.memory_space<vmem>>, vector<8x256xbf16>,
    return
  }
  func.func @transform_0(%arg0: i32, %arg1: i32) -> (i32, i32) {
    %c0_i32 = arith.constant 0 : i32
    return %arg0, %arg1 : i32, i32
  }
  func.func @transform_1(%arg0: i32, %arg1: i32) -> (i32, i32) {
    %c0_i32 = arith.constant 0 : i32
    %c0_i32_0 = arith.constant 0 : i32
    return %arg0, %c0_i32 : i32, i32
  }
  func.func @transform_2(%arg0: i32, %arg1: i32) -> (i32, i32) {
    %c0_i32 = arith.constant 0 : i32
    %c0_i32_0 = arith.constant 0 : i32
    return %arg0, %c0_i32 : i32, i32
  }
  func.func @transform_3(%arg0: i32, %arg1: i32) -> (i32, i32) {
    %c0_i32 = arith.constant 0 : i32
    return %arg0, %arg1 : i32, i32
  }
}

</mosaic_0001>

<llo_original>
// kernel: tpu_custom_call.1
$region0: #{tpu_custom_call.1}
  #allocation0 [shape = 'u32[]', space=smem, size = 0x4, offset = 0x4, fixed_abs, tag = 'smem constant byte address 0x4 - core index']
  #allocation1 [shape = 'u32[144,128]{1,0:T(1,128)}', space=vmem, size = 0x12000, scoped, tag = 'internal scratch']
  %s0 = inlined_call_operand.vmem [shape: bf16[8,256], index: 0, kind: input, shape index: {}]
  %s1 = inlined_call_operand.vmem [shape: f32[8,1], index: 1, kind: input, shape index: {}]
  %s2 = inlined_call_operand.vmem [shape: f32[8,1], index: 2, kind: input, shape index: {}]
  %s3 = inlined_call_operand.hbm [shape: bf16[8,256], index: 3, kind: output, shape index: {}]
  %s4 = sld [smem:[#allocation0]]
  $region22: #{tpu_custom_call.1} parent=0
    _
  %s6 = ssub.s32 1, %s4
  %s7 = scalar_select 0, %s6, %s4
  $region1: #{tpu_custom_call.1} parent=0
    #allocation2 [shape = 'u8[4096]{0}', space=vmem, size = 0x1000, scoped, tag = 'output window, operand 0, single buffered']
    #allocation3 [shape = 's32[1]{0}', space=sflag, size = 0x4, scoped, tag = 'scoped memory for tpu_custom_call.1']
    %8 = vsyncpa [#allocation3], 0
    // Predicated region
    $region2: #{tpu_custom_call.1} parent=1 // pred_check
      _
    $region3: #{tpu_custom_call.1} parent=1 // pred_check_branch
      %10 = sbr.rel (0) target = $region5
    $region4: #{tpu_custom_call.1} parent=1 // pred_region
      _
    $region5: #{tpu_custom_call.1} parent=1 // pred_fallthru
      _
    // Predicated region
    $region6: #{tpu_custom_call.1} parent=1 // pred_check
      _
    $region7: #{tpu_custom_call.1} parent=1 // pred_check_branch
      %12 = sbr.rel (0) target = $region9
    $region8: #{tpu_custom_call.1} parent=1 // pred_region
      _
    $region9: #{tpu_custom_call.1} parent=1 // pred_fallthru
      _
    // Predicated region
    $region10: #{tpu_custom_call.1} parent=1 // pred_check
      _
    $region11: #{tpu_custom_call.1} parent=1 // pred_check_branch
      %14 = sbr.rel (0) target = $region13
    $region12: #{tpu_custom_call.1} parent=1 // pred_region
      _
    $region13: #{tpu_custom_call.1} parent=1 // pred_fallthru
      _
    %v15 = vld [vmem:[%s0] sm:$0xff]
    %v16 = vld [vmem:[%s1] sm:$0xff]
    %v17 = vunpack.c.l.bf16 %v15
    %v18 = vunpack.c.h.bf16 %v15
    %20 = vset.pattern.permute.xlu0 0
    %21 = vperm.xlu0 %20, %v16
    %v22 = vpop.permute.xlu0 %21
    %v24 = vmul.f32 %v17, %v22
    %v25 = vmul.f32 %v18, %v22
    %v26 = vld [vmem:[%s2] sm:$0xff]
    %28 = vset.pattern.permute.xlu0 0
    %29 = vperm.xlu0 %28, %v26
    %v30 = vpop.permute.xlu0 %29
    %v32 = vadd.f32 %v24, %v30
    %v33 = vadd.f32 %v25, %v30
    %v34 = vpack.c.bf16 %v32, %v32
    %v35 = vpack.c.bf16 %v33, %v33
    %v38 = vunpack.c.l.b16 %v34
    %v39 = vunpack.c.l.b16 %v35
    %v40 = vpack.c.b16 %v39, %v38
    %42 = vst [vmem:[#allocation2] sm:$0xff] %v40
    // Predicated region
    $region14: #{tpu_custom_call.1} parent=1 // pred_check
      _
    $region15: #{tpu_custom_call.1} parent=1 // pred_check_branch
      %44 = sbr.rel (0) target = $region17
    $region16: #{tpu_custom_call.1} parent=1 // pred_region
      %s46 = ssub.s32 128, 128
      %47 = vsyncadd [#allocation3], %s46
      %s49 = sshll.u32 [#allocation2], 4
      %s50 = int_to_ptr.vmem [resolvable:$true] %s49
      %52 = dma.vmem_to_hbm [thread:$0]  %s50, 128, %s3, [#allocation3]
    $region17: #{tpu_custom_call.1} parent=1 // pred_fallthru
      _
    // Predicated region
    $region18: #{tpu_custom_call.1} parent=1 // pred_check
      _
    $region19: #{tpu_custom_call.1} parent=1 // pred_check_branch
      %54 = sbr.rel (0) target = $region21
    $region20: #{tpu_custom_call.1} parent=1 // pred_region
      %55 = dma.done [#allocation3], 128
    $region21: #{tpu_custom_call.1} parent=1 // pred_fallthru
      _
    %56 = vsyncpa [#allocation3], 1

</llo_original>
